<compile_context>
chip_gen: v5e
topology: v5e:2x2
jax: 0.10.0
libtpu: 0.0.40
codegen_flags: <defaults>
</compile_context>

<pallas_src>
import functools

import jax
import jax.numpy as jnp
from jax.experimental import pallas as pl
from jax.experimental.pallas import tpu as pltpu


# ----------------------------------------------------------------------------
# Fused Pallas kernel: conv bank + max-pool + ReLU + FC for TB batch rows.
# ----------------------------------------------------------------------------
def fused_cnn_kernel(x_ref, w_ref, mask_ref, cb_ref, fcw_ref, fcb_ref, o_ref,
                     *, seq_len, max_k, in_ch, n_kernels, filter_size, tb):
    """
    x_ref:    (TB, L, C)          time-major signals, compute dtype
    w_ref:    (Kmax*C, NK*F)      im2col conv weights (taps j>=k zero-padded)
    mask_ref: (L, NK*F)           0 where t < l_out(kernel), -1e30 otherwise
    cb_ref:   (1, NK*F)           conv biases (f32)
    fcw_ref:  (NK*F, Npad)        FC weight, zero-padded to 128 lanes
    fcb_ref:  (1, Npad)           FC bias (f32), zero-padded
    o_ref:    (TB, Npad)          logits (f32, padded)
    """
    L, C, F, NK = seq_len, in_ch, filter_size, n_kernels

    # im2col activation: tap j of x is a static sublane roll (XLU, 32-bit) of
    # the flattened (TB*L, C) signal; rows that wrap across a batch boundary
    # only land in time positions that are masked (or hit zero weight columns).
    x2 = x_ref[...].astype(jnp.float32).reshape(tb * L, C)          # (TB*L, C)
    parts = [x2]
    for j in range(1, max_k):
        parts.append(pltpu.roll(x2, shift=tb * L - j, axis=0))      # x[t+j] @ row t
    xcat = jnp.concatenate(parts, axis=1).astype(w_ref.dtype)       # (TB*L, Kmax*C)

    # ONE MXU matmul = every tap of every kernel size for all TB*L rows.
    y = jnp.dot(xcat, w_ref[...], preferred_element_type=jnp.float32)
    y = y.reshape(tb, L, NK * F) + mask_ref[...]                    # mask invalid t

    # Global time max, then bias + ReLU (exact reordering), then ONE fused FC.
    pooled = jnp.max(y, axis=1)                                     # (TB, NK*F)
    pooled = jnp.maximum(pooled + cb_ref[...], 0.0)
    # TODO(synk): nn.Dropout omitted (identity; eval-mode semantics).
    logits = jnp.dot(pooled.astype(fcw_ref.dtype), fcw_ref[...],
                     preferred_element_type=jnp.float32) + fcb_ref[...]
    o_ref[...] = logits.astype(o_ref.dtype)


# ----------------------------------------------------------------------------
# Host-side wrapper (layout plumbing + pallas_call)
# ----------------------------------------------------------------------------
def cnn_forward(params, signals, *, compute_dtype=jnp.bfloat16, tb=8):
    """Replicates CNN.forward (eval mode). signals: (B, lfcc_size, L) float32.

    compute_dtype sets the MXU input dtype. bf16 (default) is native on the
    MXU of every TPU generation (v5e included); accumulation and the
    bias/ReLU/max epilogue always run in f32. Pass jnp.float32 for
    bit-closer numerics.
    """
    B, C, L = signals.shape
    convs = params["convs"]
    kernels = tuple(int(k) for (_, _, k) in convs)
    F = int(convs[0][0].shape[0])
    NK = len(kernels)
    Kmax = max(kernels)
    if L < Kmax:
        raise ValueError(f"sequence length {L} < largest conv kernel {Kmax}")
    num_classes = params["fc_w"].shape[1]
    n_pad = ((num_classes + 127) // 128) * 128

    tb = max(1, min(int(tb), 32))
    b_pad = ((B + tb - 1) // tb) * tb

    # One-pass layout plumbing (transpose fused with the compute-dtype cast).
    x_t = jnp.transpose(signals, (0, 2, 1)).astype(compute_dtype)    # (B, L, C)
    if b_pad != B:
        x_t = jnp.concatenate(
            [x_t, jnp.zeros((b_pad - B, L, C), compute_dtype)], axis=0)

    # im2col conv weight: row j*C + c, col ki*F + f  <-  w_ki[f, c, j] (0 if j>=k),
    # per-column validity mask, concatenated conv bias, lane-padded FC weight/bias.
    w_im2col = jnp.zeros((Kmax * C, NK * F), jnp.float32)
    conv_b = jnp.zeros((1, NK * F), jnp.float32)
    mask = jnp.zeros((L, NK * F), jnp.float32)
    for ki, (w, b, k) in enumerate(convs):
        for j in range(k):
            w_im2col = w_im2col.at[j * C:(j + 1) * C,
                                   ki * F:(ki + 1) * F].set(w[:, :, j].T)
        conv_b = conv_b.at[0, ki * F:(ki + 1) * F].set(b)
        mask = mask.at[L - k + 1:, ki * F:(ki + 1) * F].set(-1e30)
    w_im2col = w_im2col.astype(compute_dtype)

    fc_w = jnp.zeros((NK * F, n_pad), compute_dtype).at[:, :num_classes].set(
        params["fc_w"].astype(compute_dtype))
    fc_b = jnp.zeros((1, n_pad), jnp.float32).at[:, :num_classes].set(
        params["fc_b"].reshape(1, num_classes).astype(jnp.float32))

    kernel = functools.partial(
        fused_cnn_kernel, seq_len=L, max_k=Kmax, in_ch=C, n_kernels=NK,
        filter_size=F, tb=tb)

    # Rough per-step VMEM footprint; only raise the scoped limit when needed.
    itemsize = jnp.dtype(compute_dtype).itemsize
    vmem_need = (2 * tb * L * C * itemsize                     # x double buffer
                 + 2 * tb * n_pad * 4                          # out double buffer
                 + (Kmax * C + n_pad + L + 2) * NK * F * 4     # resident weights
                 + 6 * tb * L * (Kmax * C + NK * F) * 4)       # intermediates
    compiler_params = pltpu.CompilerParams(
        dimension_semantics=("parallel",),
        vmem_limit_bytes=(int(min(2 * vmem_need, 64 * 2**20))
                          if vmem_need > 8 * 2**20 else None))

    out = pl.pallas_call(
        kernel,
        out_shape=jax.ShapeDtypeStruct((b_pad, n_pad), jnp.float32),
        grid=(b_pad // tb,),
        in_specs=[
            pl.BlockSpec((tb, L, C), lambda i: (i, 0, 0)),         # per-step rows
            pl.BlockSpec((Kmax * C, NK * F), lambda i: (0, 0)),    # VMEM-resident
            pl.BlockSpec((L, NK * F), lambda i: (0, 0)),
            pl.BlockSpec((1, NK * F), lambda i: (0, 0)),
            pl.BlockSpec((NK * F, n_pad), lambda i: (0, 0)),
            pl.BlockSpec((1, n_pad), lambda i: (0, 0)),
        ],
        out_specs=pl.BlockSpec((tb, n_pad), lambda i: (i, 0)),
        compiler_params=compiler_params,
    )(x_t, w_im2col, mask, conv_b, fc_w, fc_b)
    # TODO(synk): for very long L, add a trailing "arbitrary" grid axis over
    # L-chunks with a running-max VMEM scratch (carry the last max(k)-1 rows)
    # so per-step VMEM stays bounded on v7x (64 MiB) and the x DMA pipelines.
    return out[:B, :num_classes]


# ----------------------------------------------------------------------------
# Pure-JAX reference (correctness verification; matches the PyTorch forward)
# ----------------------------------------------------------------------------
def cnn_reference(params, signals):
    pooled = []
    for (w, b, _) in params["convs"]:
        y = jax.lax.conv_general_dilated(
            signals, w, window_strides=(1,), padding="VALID",
            dimension_numbers=("NCH", "OIH", "NCH"),
            precision=jax.lax.Precision.HIGHEST)
        y = jnp.maximum(y + b[None, :, None], 0.0)
        pooled.append(jnp.max(y, axis=2))
    x_fc = jnp.concatenate(pooled, axis=1)
    return jnp.dot(x_fc, params["fc_w"],
                   precision=jax.lax.Precision.HIGHEST) + params["fc_b"]


# ----------------------------------------------------------------------------
# Deterministic parameter init (shapes follow the PyTorch __init__)
# ----------------------------------------------------------------------------
def init_params(key, config, num_classes):
    lfcc = config["lfcc_size"]
    fw = config["filter_size"]
    kernels = config["kernels"]
    keys = jax.random.split(key, 2 * len(kernels) + 2)
    convs = []
    for i, k in enumerate(kernels):
        w = 0.1 * jax.random.normal(keys[2 * i], (fw, lfcc, k), jnp.float32)
        b = 0.1 * jax.random.normal(keys[2 * i + 1], (fw,), jnp.float32)
        convs.append((w, b, k))
    fc_w = 0.1 * jax.random.normal(
        keys[-2], (fw * len(kernels), num_classes), jnp.float32)
    fc_b = 0.1 * jax.random.normal(keys[-1], (1, num_classes), jnp.float32)
    return {"convs": convs, "fc_w": fc_w, "fc_b": fc_b}


if __name__ == "__main__":
    config = {
        "lfcc_size": 8,        # Conv1d in_channels
        "filter_size": 16,     # Conv1d out_channels (filter_width)
        "kernels": [2, 3, 4],  # kernel sizes of the conv bank
        "dropout": 0.1,
    }
    num_classes = 4
    B, L = 2, 16

    key = jax.random.PRNGKey(0)
    k_param, k_x = jax.random.split(key)
    params = init_params(k_param, config, num_classes)
    signals = jax.random.normal(k_x, (B, config["lfcc_size"], L), jnp.float32)

    ref = cnn_reference(params, signals)

    # f32 compute path (tight check).
    logits_f32 = jax.block_until_ready(
        cnn_forward(params, signals, compute_dtype=jnp.float32))
    assert logits_f32.shape == (B, num_classes), logits_f32.shape
    assert jnp.allclose(logits_f32, ref, atol=2e-2, rtol=2e-2), float(
        jnp.max(jnp.abs(logits_f32 - ref)))

    # Default bf16 compute path (bf16 MXU inputs, f32 accumulate/epilogue).
    logits = jax.block_until_ready(cnn_forward(params, signals))
    assert logits.shape == (B, num_classes), logits.shape
    assert jnp.allclose(logits, ref, atol=5e-2, rtol=5e-2), float(
        jnp.max(jnp.abs(logits - ref)))

    print("KERNEL_OK")
</pallas_src>

<mosaic_0001>
module attributes {stable_mosaic.version = 11 : i64} {
  func.func @fused_cnn_kernel(%arg0: i32, %arg1: memref<8x16x8xf32, #tpu.memory_space<vmem>>, %arg2: memref<32x48xf32, #tpu.memory_space<vmem>>, %arg3: memref<16x48xf32, #tpu.memory_space<vmem>>, %arg4: memref<1x48xf32, #tpu.memory_space<vmem>>, %arg5: memref<48x128xf32, #tpu.memory_space<vmem>>, %arg6: memref<1x128xf32, #tpu.memory_space<vmem>>, %arg7: memref<8x128xf32, #tpu.memory_space<vmem>>) attributes {dimension_semantics = [#tpu.dimension_semantics<parallel>], iteration_bounds = array<i64: 1>, scalar_prefetch = 0 : i64, scratch_operands = 0 : i64, tpu.core_type = #tpu.core_type<tc>, window_params = [{transform_indices = @transform_0, window_bounds = array<i64: 8, 16, 8>}, {pipeline_mode = #tpu.pipeline_mode<synchronous>, transform_indices = @transform_1, window_bounds = array<i64: 32, 48>}, {pipeline_mode = #tpu.pipeline_mode<synchronous>, transform_indices = @transform_2, window_bounds = array<i64: 16, 48>}, {pipeline_mode = #tpu.pipeline_mode<synchronous>, transform_indices = @transform_3, window_bounds = array<i64: 1, 48>}, {pipeline_mode = #tpu.pipeline_mode<synchronous>, transform_indices = @transform_4, window_bounds = array<i64: 48, 128>}, {pipeline_mode = #tpu.pipeline_mode<synchronous>, transform_indices = @transform_5, window_bounds = array<i64: 1, 128>}, {transform_indices = @transform_6, window_bounds = array<i64: 8, 128>}]} {
    %c0 = arith.constant 0 : index
    %c0_0 = arith.constant 0 : index
    %c0_1 = arith.constant 0 : index
    %0 = vector.load %arg1[%c0, %c0_0, %c0_1] : memref<8x16x8xf32, #tpu.memory_space<vmem>>, vector<8x16x8xf32>
    %1 = vector.shape_cast %0 : vector<8x16x8xf32> to vector<128x8xf32>
    %c127_i32 = arith.constant 127 : i32
    %2 = tpu.dynamic_rotate %1 by %c127_i32 dim 0 : vector<128x8xf32>, i32 -> vector<128x8xf32>
    %c126_i32 = arith.constant 126 : i32
    %3 = tpu.dynamic_rotate %1 by %c126_i32 dim 0 : vector<128x8xf32>, i32 -> vector<128x8xf32>
    %c125_i32 = arith.constant 125 : i32
    %4 = tpu.dynamic_rotate %1 by %c125_i32 dim 0 : vector<128x8xf32>, i32 -> vector<128x8xf32>
    %5 = tpu.concatenate %1, %2, %3, %4 in 1 : vector<128x8xf32>, vector<128x8xf32>, vector<128x8xf32>, vector<128x8xf32> -> vector<128x32xf32>
    %c0_2 = arith.constant 0 : index
    %c0_3 = arith.constant 0 : index
    %6 = vector.load %arg2[%c0_2, %c0_3] : memref<32x48xf32, #tpu.memory_space<vmem>>, vector<32x48xf32>
    %cst = arith.constant dense<0.000000e+00> : vector<128x48xf32>
    %7 = tpu.matmul %5, %6, %cst {dimension_numbers = #tpu.dot_dimension_numbers<[1], [0], [0], [1], [0, 0, 1, 1], [], []>} : vector<128x32xf32>, vector<32x48xf32>, vector<128x48xf32> -> vector<128x48xf32>
    %8 = vector.shape_cast %7 : vector<128x48xf32> to vector<8x16x48xf32>
    %c0_4 = arith.constant 0 : index
    %c0_5 = arith.constant 0 : index
    %9 = vector.load %arg3[%c0_4, %c0_5] : memref<16x48xf32, #tpu.memory_space<vmem>>, vector<16x48xf32>
    %10 = vector.shape_cast %9 : vector<16x48xf32> to vector<1x16x48xf32>
    %11 = vector.broadcast %10 : vector<1x16x48xf32> to vector<8x16x48xf32>
    %12 = arith.addf %8, %11 : vector<8x16x48xf32>
    %cst_6 = arith.constant dense<0xFF800000> : vector<8x48xf32>
    %13 = vector.multi_reduction <maximumf>, %12, %cst_6 [1] : vector<8x16x48xf32> to vector<8x48xf32>
    %c0_7 = arith.constant 0 : index
    %c0_8 = arith.constant 0 : index
    %14 = vector.load %arg4[%c0_7, %c0_8] : memref<1x48xf32, #tpu.memory_space<vmem>>, vector<1x48xf32>
    %15 = vector.broadcast %14 : vector<1x48xf32> to vector<8x48xf32>
    %16 = arith.addf %13, %15 : vector<8x48xf32>
    %cst_9 = arith.constant 0.000000e+00 : f32
    %17 = vector.broadcast %cst_9 : f32 to vector<8x48xf32>
    %18 = arith.maximumf %16, %17 : vector<8x48xf32>
    %c0_10 = arith.constant 0 : index
    %c0_11 = arith.constant 0 : index
    %19 = vector.load %arg5[%c0_10, %c0_11] : memref<48x128xf32, #tpu.memory_space<vmem>>, vector<48x128xf32>
    %cst_12 = arith.constant dense<0.000000e+00> : vector<8x128xf32>
    %20 = tpu.matmul %18, %19, %cst_12 {dimension_numbers = #tpu.dot_dimension_numbers<[1], [0], [0], [1], [0, 0, 1, 1], [], []>} : vector<8x48xf32>, vector<48x128xf32>, vector<8x128xf32> -> vector<8x128xf32>
    %c0_13 = arith.constant 0 : index
    %c0_14 = arith.constant 0 : index
    %21 = vector.load %arg6[%c0_13, %c0_14] : memref<1x128xf32, #tpu.memory_space<vmem>>, vector<1x128xf32>
    %22 = vector.broadcast %21 : vector<1x128xf32> to vector<8x128xf32>
    %23 = arith.addf %20, %22 : vector<8x128xf32>
    %c0_15 = arith.constant 0 : index
    %c0_16 = arith.constant 0 : index
    %24 = vector.load %arg7[%c0_15, %c0_16] : memref<8x128xf32, #tpu.memory_space<vmem>>, vector<8x128xf32>
    tpu.vector_store %arg7[%c0_15, %c0_16], %23 {strides = array<i32>} : memref<8x128xf32, #tpu.memory_space<vmem>>, vector<8x128xf32>,
    return
  }
  func.func @transform_0(%arg0: i32) -> (i32, i32, i32) {
    %c0_i32 = arith.constant 0 : i32
    %c0_i32_0 = arith.constant 0 : i32
    %c0_i32_1 = arith.constant 0 : i32
    return %arg0, %c0_i32, %c0_i32_0 : i32, i32, i32
  }
  func.func @transform_1(%arg0: i32) -> (i32, i32) {
    %c0_i32 = arith.constant 0 : i32
    %c0_i32_0 = arith.constant 0 : i32
    %c0_i32_1 = arith.constant 0 : i32
    return %c0_i32, %c0_i32_0 : i32, i32
  }
  func.func @transform_2(%arg0: i32) -> (i32, i32) {
    %c0_i32 = arith.constant 0 : i32
    %c0_i32_0 = arith.constant 0 : i32
    %c0_i32_1 = arith.constant 0 : i32
    return %c0_i32, %c0_i32_0 : i32, i32
  }
  func.func @transform_3(%arg0: i32) -> (i32, i32) {
    %c0_i32 = arith.constant 0 : i32
    %c0_i32_0 = arith.constant 0 : i32
    %c0_i32_1 = arith.constant 0 : i32
    return %c0_i32, %c0_i32_0 : i32, i32
  }
  func.func @transform_4(%arg0: i32) -> (i32, i32) {
    %c0_i32 = arith.constant 0 : i32
    %c0_i32_0 = arith.constant 0 : i32
    %c0_i32_1 = arith.constant 0 : i32
    return %c0_i32, %c0_i32_0 : i32, i32
  }
  func.func @transform_5(%arg0: i32) -> (i32, i32) {
    %c0_i32 = arith.constant 0 : i32
    %c0_i32_0 = arith.constant 0 : i32
    %c0_i32_1 = arith.constant 0 : i32
    return %c0_i32, %c0_i32_0 : i32, i32
  }
  func.func @transform_6(%arg0: i32) -> (i32, i32) {
    %c0_i32 = arith.constant 0 : i32
    %c0_i32_0 = arith.constant 0 : i32
    return %arg0, %c0_i32 : i32, i32
  }
}

</mosaic_0001>

<llo_original>
// kernel: tpu_custom_call.1
$region0: #{tpu_custom_call.1}
  #allocation0 [shape = 'u32[]', space=smem, size = 0x4, offset = 0x4, fixed_abs, tag = 'smem constant byte address 0x4 - core index']
  #allocation1 [shape = 'u32[72,128]{1,0:T(1,128)}', space=vmem, size = 0x9000, scoped, tag = 'internal scratch']
  %s0 = inlined_call_operand.vmem [shape: f32[8,16,8], index: 0, kind: input, shape index: {}]
  %s1 = inlined_call_operand.vmem [shape: f32[32,48], index: 1, kind: input, shape index: {}]
  %s2 = inlined_call_operand.vmem [shape: f32[16,48], index: 2, kind: input, shape index: {}]
  %s3 = inlined_call_operand.vmem [shape: f32[1,48], index: 3, kind: input, shape index: {}]
  %s4 = inlined_call_operand.vmem [shape: f32[48,128], index: 4, kind: input, shape index: {}]
  %s5 = inlined_call_operand.vmem [shape: f32[1,128], index: 5, kind: input, shape index: {}]
  %s6 = inlined_call_operand.hbm [shape: f32[8,128], index: 6, kind: output, shape index: {}]
  %s7 = sld [smem:[#allocation0]]
  $region34: #{tpu_custom_call.1} parent=0
    _
  %s9 = ssub.s32 1, %s7
  %s10 = scalar_select 0, %s9, %s7
  $region1: #{tpu_custom_call.1} parent=0
    #allocation2 [shape = 'u8[4096]{0}', space=vmem, size = 0x1000, scoped, tag = 'output window, operand 0, single buffered']
    #allocation3 [shape = 's32[1]{0}', space=sflag, size = 0x4, scoped, tag = 'scoped memory for tpu_custom_call.1']
    %11 = vsyncpa [#allocation3], 0
    // Predicated region
    $region2: #{tpu_custom_call.1} parent=1 // pred_check
      _
    $region3: #{tpu_custom_call.1} parent=1 // pred_check_branch
      %13 = sbr.rel (0) target = $region5
    $region4: #{tpu_custom_call.1} parent=1 // pred_region
      _
    $region5: #{tpu_custom_call.1} parent=1 // pred_fallthru
      _
    // Predicated region
    $region6: #{tpu_custom_call.1} parent=1 // pred_check
      _
    $region7: #{tpu_custom_call.1} parent=1 // pred_check_branch
      %15 = sbr.rel (0) target = $region9
    $region8: #{tpu_custom_call.1} parent=1 // pred_region
      _
    $region9: #{tpu_custom_call.1} parent=1 // pred_fallthru
      _
    // Predicated region
    $region10: #{tpu_custom_call.1} parent=1 // pred_check
      _
    $region11: #{tpu_custom_call.1} parent=1 // pred_check_branch
      %17 = sbr.rel (0) target = $region13
    $region12: #{tpu_custom_call.1} parent=1 // pred_region
      _
    $region13: #{tpu_custom_call.1} parent=1 // pred_fallthru
      _
    // Predicated region
    $region14: #{tpu_custom_call.1} parent=1 // pred_check
      _
    $region15: #{tpu_custom_call.1} parent=1 // pred_check_branch
      %19 = sbr.rel (0) target = $region17
    $region16: #{tpu_custom_call.1} parent=1 // pred_region
      _
    $region17: #{tpu_custom_call.1} parent=1 // pred_fallthru
      _
    // Predicated region
    $region18: #{tpu_custom_call.1} parent=1 // pred_check
      _
    $region19: #{tpu_custom_call.1} parent=1 // pred_check_branch
      %21 = sbr.rel (0) target = $region21
    $region20: #{tpu_custom_call.1} parent=1 // pred_region
      _
    $region21: #{tpu_custom_call.1} parent=1 // pred_fallthru
      _
    // Predicated region
    $region22: #{tpu_custom_call.1} parent=1 // pred_check
      _
    $region23: #{tpu_custom_call.1} parent=1 // pred_check_branch
      %23 = sbr.rel (0) target = $region25
    $region24: #{tpu_custom_call.1} parent=1 // pred_region
      _
    $region25: #{tpu_custom_call.1} parent=1 // pred_fallthru
      _
    %v24 = vld [vmem:[%s0] sm:$0xff]
    %v25 = vld [vmem:[%s0 + $0x8] sm:$0xff]
    %v26 = vld [vmem:[%s0 + $0x10] sm:$0xff]
    %v27 = vld [vmem:[%s0 + $0x18] sm:$0xff]
    %v28 = vld [vmem:[%s0 + $0x20] sm:$0xff]
    %v29 = vld [vmem:[%s0 + $0x28] sm:$0xff]
    %v30 = vld [vmem:[%s0 + $0x30] sm:$0xff]
    %v31 = vld [vmem:[%s0 + $0x38] sm:$0xff]
    %v32 = vld [vmem:[%s0 + $0x40] sm:$0xff]
    %v33 = vld [vmem:[%s0 + $0x48] sm:$0xff]
    %v34 = vld [vmem:[%s0 + $0x50] sm:$0xff]
    %v35 = vld [vmem:[%s0 + $0x58] sm:$0xff]
    %v36 = vld [vmem:[%s0 + $0x60] sm:$0xff]
    %v37 = vld [vmem:[%s0 + $0x68] sm:$0xff]
    %v38 = vld [vmem:[%s0 + $0x70] sm:$0xff]
    %v39 = vld [vmem:[%s0 + $0x78] sm:$0xff]
    %v40 = vrot.slane %v24, 1
    %v41 = vrot.slane %v25, 1
    %v42 = vrot.slane %v26, 1
    %v43 = vrot.slane %v27, 1
    %v44 = vrot.slane %v28, 1
    %v45 = vrot.slane %v29, 1
    %v46 = vrot.slane %v30, 1
    %v47 = vrot.slane %v31, 1
    %v48 = vrot.slane %v32, 1
    %v49 = vrot.slane %v33, 1
    %v50 = vrot.slane %v34, 1
    %v51 = vrot.slane %v35, 1
    %v52 = vrot.slane %v36, 1
    %v53 = vrot.slane %v37, 1
    %v54 = vrot.slane %v38, 1
    %v55 = vrot.slane %v39, 1
    %v56 = vlaneseq
    %v57 = vshrl.u32 %v56, 7
    %vm58 = vcmp.lt.s32.totalorder %v57, 7
    %v59 = vsel %vm58, %v54, %v55
    %v60 = vsel %vm58, %v53, %v54
    %v61 = vsel %vm58, %v52, %v53
    %v62 = vsel %vm58, %v51, %v52
    %v63 = vsel %vm58, %v50, %v51
    %v64 = vsel %vm58, %v49, %v50
    %v65 = vsel %vm58, %v48, %v49
    %v66 = vsel %vm58, %v47, %v48
    %v67 = vsel %vm58, %v46, %v47
    %v68 = vsel %vm58, %v45, %v46
    %v69 = vsel %vm58, %v44, %v45
    %v70 = vsel %vm58, %v43, %v44
    %v71 = vsel %vm58, %v42, %v43
    %v72 = vsel %vm58, %v41, %v42
    %v73 = vsel %vm58, %v40, %v41
    %v74 = vsel %vm58, %v55, %v40
    %v75 = vrot.slane %v24, 2
    %v76 = vrot.slane %v25, 2
    %v77 = vrot.slane %v26, 2
    %v78 = vrot.slane %v27, 2
    %v79 = vrot.slane %v28, 2
    %v80 = vrot.slane %v29, 2
    %v81 = vrot.slane %v30, 2
    %v82 = vrot.slane %v31, 2
    %v83 = vrot.slane %v32, 2
    %v84 = vrot.slane %v33, 2
    %v85 = vrot.slane %v34, 2
    %v86 = vrot.slane %v35, 2
    %v87 = vrot.slane %v36, 2
    %v88 = vrot.slane %v37, 2
    %v89 = vrot.slane %v38, 2
    %v90 = vrot.slane %v39, 2
    %vm91 = vcmp.lt.s32.totalorder %v57, 6
    %v92 = vsel %vm91, %v89, %v90
    %v93 = vsel %vm91, %v88, %v89
    %v94 = vsel %vm91, %v87, %v88
    %v95 = vsel %vm91, %v86, %v87
    %v96 = vsel %vm91, %v85, %v86
    %v97 = vsel %vm91, %v84, %v85
    %v98 = vsel %vm91, %v83, %v84
    %v99 = vsel %vm91, %v82, %v83
    %v100 = vsel %vm91, %v81, %v82
    %v101 = vsel %vm91, %v80, %v81
    %v102 = vsel %vm91, %v79, %v80
    %v103 = vsel %vm91, %v78, %v79
    %v104 = vsel %vm91, %v77, %v78
    %v105 = vsel %vm91, %v76, %v77
    %v106 = vsel %vm91, %v75, %v76
    %v107 = vsel %vm91, %v90, %v75
    %v108 = vrot.slane %v24, 3
    %v109 = vrot.slane %v25, 3
    %v110 = vrot.slane %v26, 3
    %v111 = vrot.slane %v27, 3
    %v112 = vrot.slane %v28, 3
    %v113 = vrot.slane %v29, 3
    %v114 = vrot.slane %v30, 3
    %v115 = vrot.slane %v31, 3
    %v116 = vrot.slane %v32, 3
    %v117 = vrot.slane %v33, 3
    %v118 = vrot.slane %v34, 3
    %v119 = vrot.slane %v35, 3
    %v120 = vrot.slane %v36, 3
    %v121 = vrot.slane %v37, 3
    %v122 = vrot.slane %v38, 3
    %v123 = vrot.slane %v39, 3
    %vm124 = vcmp.lt.s32.totalorder %v57, 5
    %v125 = vsel %vm124, %v122, %v123
    %v126 = vsel %vm124, %v121, %v122
    %v127 = vsel %vm124, %v120, %v121
    %v128 = vsel %vm124, %v119, %v120
    %v129 = vsel %vm124, %v118, %v119
    %v130 = vsel %vm124, %v117, %v118
    %v131 = vsel %vm124, %v116, %v117
    %v132 = vsel %vm124, %v115, %v116
    %v133 = vsel %vm124, %v114, %v115
    %v134 = vsel %vm124, %v113, %v114
    %v135 = vsel %vm124, %v112, %v113
    %v136 = vsel %vm124, %v111, %v112
    %v137 = vsel %vm124, %v110, %v111
    %v138 = vsel %vm124, %v109, %v110
    %v139 = vsel %vm124, %v108, %v109
    %v140 = vsel %vm124, %v123, %v108
    %157 = vrot.lane.b32.xlu0 %v73, 8
    %v158 = vpop.permute.xlu0 %157
    %159 = vrot.lane.b32.xlu0 %v72, 8
    %v160 = vpop.permute.xlu0 %159
    %161 = vrot.lane.b32.xlu0 %v71, 8
    %v162 = vpop.permute.xlu0 %161
    %163 = vrot.lane.b32.xlu0 %v70, 8
    %v164 = vpop.permute.xlu0 %163
    %165 = vrot.lane.b32.xlu0 %v69, 8
    %v166 = vpop.permute.xlu0 %165
    %167 = vrot.lane.b32.xlu0 %v68, 8
    %v168 = vpop.permute.xlu0 %167
    %169 = vrot.lane.b32.xlu0 %v67, 8
    %v170 = vpop.permute.xlu0 %169
    %171 = vrot.lane.b32.xlu0 %v66, 8
    %v172 = vpop.permute.xlu0 %171
    %173 = vrot.lane.b32.xlu0 %v65, 8
    %v174 = vpop.permute.xlu0 %173
    %175 = vrot.lane.b32.xlu0 %v64, 8
    %v176 = vpop.permute.xlu0 %175
    %177 = vrot.lane.b32.xlu0 %v63, 8
    %v178 = vpop.permute.xlu0 %177
    %179 = vrot.lane.b32.xlu0 %v62, 8
    %v180 = vpop.permute.xlu0 %179
    %181 = vrot.lane.b32.xlu0 %v61, 8
    %v182 = vpop.permute.xlu0 %181
    %183 = vrot.lane.b32.xlu0 %v60, 8
    %v184 = vpop.permute.xlu0 %183
    %185 = vrot.lane.b32.xlu0 %v59, 8
    %v186 = vpop.permute.xlu0 %185
    %187 = vrot.lane.b32.xlu0 %v74, 8
    %v188 = vpop.permute.xlu0 %187
    %221 = vrot.lane.b32.xlu0 %v106, 16
    %v222 = vpop.permute.xlu0 %221
    %223 = vrot.lane.b32.xlu0 %v105, 16
    %v224 = vpop.permute.xlu0 %223
    %225 = vrot.lane.b32.xlu0 %v104, 16
    %v226 = vpop.permute.xlu0 %225
    %227 = vrot.lane.b32.xlu0 %v103, 16
    %v228 = vpop.permute.xlu0 %227
    %229 = vrot.lane.b32.xlu0 %v102, 16
    %v230 = vpop.permute.xlu0 %229
    %231 = vrot.lane.b32.xlu0 %v101, 16
    %v232 = vpop.permute.xlu0 %231
    %233 = vrot.lane.b32.xlu0 %v100, 16
    %v234 = vpop.permute.xlu0 %233
    %235 = vrot.lane.b32.xlu0 %v99, 16
    %v236 = vpop.permute.xlu0 %235
    %237 = vrot.lane.b32.xlu0 %v98, 16
    %v238 = vpop.permute.xlu0 %237
    %239 = vrot.lane.b32.xlu0 %v97, 16
    %v240 = vpop.permute.xlu0 %239
    %241 = vrot.lane.b32.xlu0 %v96, 16
    %v242 = vpop.permute.xlu0 %241
    %243 = vrot.lane.b32.xlu0 %v95, 16
    %v244 = vpop.permute.xlu0 %243
    %245 = vrot.lane.b32.xlu0 %v94, 16
    %v246 = vpop.permute.xlu0 %245
    %247 = vrot.lane.b32.xlu0 %v93, 16
    %v248 = vpop.permute.xlu0 %247
    %249 = vrot.lane.b32.xlu0 %v92, 16
    %v250 = vpop.permute.xlu0 %249
    %251 = vrot.lane.b32.xlu0 %v107, 16
    %v252 = vpop.permute.xlu0 %251
    %285 = vrot.lane.b32.xlu0 %v139, 24
    %v286 = vpop.permute.xlu0 %285
    %287 = vrot.lane.b32.xlu0 %v138, 24
    %v288 = vpop.permute.xlu0 %287
    %289 = vrot.lane.b32.xlu0 %v137, 24
    %v290 = vpop.permute.xlu0 %289
    %291 = vrot.lane.b32.xlu0 %v136, 24
    %v292 = vpop.permute.xlu0 %291
    %293 = vrot.lane.b32.xlu0 %v135, 24
    %v294 = vpop.permute.xlu0 %293
    %295 = vrot.lane.b32.xlu0 %v134, 24
    %v296 = vpop.permute.xlu0 %295
    %297 = vrot.lane.b32.xlu0 %v133, 24
    %v298 = vpop.permute.xlu0 %297
    %299 = vrot.lane.b32.xlu0 %v132, 24
    %v300 = vpop.permute.xlu0 %299
    %301 = vrot.lane.b32.xlu0 %v131, 24
    %v302 = vpop.permute.xlu0 %301
    %303 = vrot.lane.b32.xlu0 %v130, 24
    %v304 = vpop.permute.xlu0 %303
    %305 = vrot.lane.b32.xlu0 %v129, 24
    %v306 = vpop.permute.xlu0 %305
    %307 = vrot.lane.b32.xlu0 %v128, 24
    %v308 = vpop.permute.xlu0 %307
    %309 = vrot.lane.b32.xlu0 %v127, 24
    %v310 = vpop.permute.xlu0 %309
    %311 = vrot.lane.b32.xlu0 %v126, 24
    %v312 = vpop.permute.xlu0 %311
    %313 = vrot.lane.b32.xlu0 %v125, 24
    %v314 = vpop.permute.xlu0 %313
    %315 = vrot.lane.b32.xlu0 %v140, 24
    %v316 = vpop.permute.xlu0 %315
    %vm333 = vcmask 64512
    %v334 = vsel %vm333, %v24, %v158
    %v335 = vsel %vm333, %v25, %v160
    %v336 = vsel %vm333, %v26, %v162
    %v337 = vsel %vm333, %v27, %v164
    %v338 = vsel %vm333, %v28, %v166
    %v339 = vsel %vm333, %v29, %v168
    %v340 = vsel %vm333, %v30, %v170
    %v341 = vsel %vm333, %v31, %v172
    %v342 = vsel %vm333, %v32, %v174
    %v343 = vsel %vm333, %v33, %v176
    %v344 = vsel %vm333, %v34, %v178
    %v345 = vsel %vm333, %v35, %v180
    %v346 = vsel %vm333, %v36, %v182
    %v347 = vsel %vm333, %v37, %v184
    %v348 = vsel %vm333, %v38, %v186
    %v349 = vsel %vm333, %v39, %v188
    %vm350 = vcmask 130048
    %v351 = vsel %vm350, %v334, %v222
    %v352 = vsel %vm350, %v335, %v224
    %v353 = vsel %vm350, %v336, %v226
    %v354 = vsel %vm350, %v337, %v228
    %v355 = vsel %vm350, %v338, %v230
    %v356 = vsel %vm350, %v339, %v232
    %v357 = vsel %vm350, %v340, %v234
    %v358 = vsel %vm350, %v341, %v236
    %v359 = vsel %vm350, %v342, %v238
    %v360 = vsel %vm350, %v343, %v240
    %v361 = vsel %vm350, %v344, %v242
    %v362 = vsel %vm350, %v345, %v244
    %v363 = vsel %vm350, %v346, %v246
    %v364 = vsel %vm350, %v347, %v248
    %v365 = vsel %vm350, %v348, %v250
    %v366 = vsel %vm350, %v349, %v252
    %vm367 = vcmask 195584
    %v368 = vsel %vm367, %v351, %v286
    %v369 = vsel %vm367, %v352, %v288
    %v370 = vsel %vm367, %v353, %v290
    %v371 = vsel %vm367, %v354, %v292
    %v372 = vsel %vm367, %v355, %v294
    %v373 = vsel %vm367, %v356, %v296
    %v374 = vsel %vm367, %v357, %v298
    %v375 = vsel %vm367, %v358, %v300
    %v376 = vsel %vm367, %v359, %v302
    %v377 = vsel %vm367, %v360, %v304
    %v378 = vsel %vm367, %v361, %v306
    %v379 = vsel %vm367, %v362, %v308
    %v380 = vsel %vm367, %v363, %v310
    %v381 = vsel %vm367, %v364, %v312
    %v382 = vsel %vm367, %v365, %v314
    %v383 = vsel %vm367, %v366, %v316
    %v384 = vld [vmem:[%s1] sm:$0xff]
    %v385 = vld [vmem:[%s1 + $0x8] sm:$0xff]
    %v386 = vld [vmem:[%s1 + $0x10] sm:$0xff]
    %v387 = vld [vmem:[%s1 + $0x18] sm:$0xff]
    %vm388 = vcmask 261120
    %v390 = vsel %vm388, %v368, 0
    %v393 = vsel %vm388, %v369, 0
    %v396 = vsel %vm388, %v370, 0
    %v399 = vsel %vm388, %v371, 0
    %v402 = vsel %vm388, %v372, 0
    %v405 = vsel %vm388, %v373, 0
    %v408 = vsel %vm388, %v374, 0
    %v411 = vsel %vm388, %v375, 0
    %v414 = vsel %vm388, %v376, 0
    %v417 = vsel %vm388, %v377, 0
    %v420 = vsel %vm388, %v378, 0
    %v423 = vsel %vm388, %v379, 0
    %v426 = vsel %vm388, %v380, 0
    %v429 = vsel %vm388, %v381, 0
    %v432 = vsel %vm388, %v382, 0
    %v435 = vsel %vm388, %v383, 0
    %437 = vmatpush.msra.mxu0 0.0
    %438 = vmatpush.msra.mxu0 0.0
    %439 = vmatpush.msra.mxu0 0.0
    %440 = vmatpush.msra.mxu0 0.0
    %441 = vmatpush.msra.mxu0 0.0
    %442 = vmatpush.msra.mxu0 0.0
    %443 = vmatpush.msra.mxu0 0.0
    %444 = vmatpush.msra.mxu0 0.0
    %445 = vmatpush.msra.mxu0 0.0
    %446 = vmatpush.msra.mxu0 0.0
    %447 = vmatpush.msra.mxu0 0.0
    %448 = vmatpush.msra.mxu0 0.0
    %449 = vmatpush.msra.mxu0 %v387
    %450 = vmatpush.msra.mxu0 %v386
    %451 = vmatpush.msra.mxu0 %v385
    %452 = vmatpush.msra.mxu0 %v384
    %453 = vmatmul.f32.gmra.mxu0 %v390
    %v454 = vpop.f32.mrf.mxu0
    %v455 = vadd.f32 0.0, %v454
    %456 = vmatmul.f32.gmra.mxu0 %v393
    %v457 = vpop.f32.mrf.mxu0
    %v458 = vadd.f32 0.0, %v457
    %459 = vmatmul.f32.gmra.mxu0 %v396
    %v460 = vpop.f32.mrf.mxu0
    %v461 = vadd.f32 0.0, %v460
    %462 = vmatmul.f32.gmra.mxu0 %v399
    %v463 = vpop.f32.mrf.mxu0
    %v464 = vadd.f32 0.0, %v463
    %465 = vmatmul.f32.gmra.mxu0 %v402
    %v466 = vpop.f32.mrf.mxu0
    %v467 = vadd.f32 0.0, %v466
    %468 = vmatmul.f32.gmra.mxu0 %v405
    %v469 = vpop.f32.mrf.mxu0
    %v470 = vadd.f32 0.0, %v469
    %471 = vmatmul.f32.gmra.mxu0 %v408
    %v472 = vpop.f32.mrf.mxu0
    %v473 = vadd.f32 0.0, %v472
    %474 = vmatmul.f32.gmra.mxu0 %v411
    %v475 = vpop.f32.mrf.mxu0
    %v476 = vadd.f32 0.0, %v475
    %477 = vmatmul.f32.gmra.mxu0 %v414
    %v478 = vpop.f32.mrf.mxu0
    %v479 = vadd.f32 0.0, %v478
    %480 = vmatmul.f32.gmra.mxu0 %v417
    %v481 = vpop.f32.mrf.mxu0
    %v482 = vadd.f32 0.0, %v481
    %483 = vmatmul.f32.gmra.mxu0 %v420
    %v484 = vpop.f32.mrf.mxu0
    %v485 = vadd.f32 0.0, %v484
    %486 = vmatmul.f32.gmra.mxu0 %v423
    %v487 = vpop.f32.mrf.mxu0
    %v488 = vadd.f32 0.0, %v487
    %489 = vmatmul.f32.gmra.mxu0 %v426
    %v490 = vpop.f32.mrf.mxu0
    %v491 = vadd.f32 0.0, %v490
    %492 = vmatmul.f32.gmra.mxu0 %v429
    %v493 = vpop.f32.mrf.mxu0
    %v494 = vadd.f32 0.0, %v493
    %495 = vmatmul.f32.gmra.mxu0 %v432
    %v496 = vpop.f32.mrf.mxu0
    %v497 = vadd.f32 0.0, %v496
    %498 = vmatmul.f32.gmra.mxu0 %v435
    %v499 = vpop.f32.mrf.mxu0
    %v500 = vadd.f32 0.0, %v499
    %501 = vdwg.mxu0
    %v502 = vld [vmem:[%s2] sm:$0xff]
    %v503 = vld [vmem:[%s2 + $0x8] sm:$0xff]
    %v504 = vadd.f32 %v455, %v502
    %v505 = vadd.f32 %v458, %v503
    %v506 = vadd.f32 %v461, %v502
    %v507 = vadd.f32 %v464, %v503
    %v508 = vadd.f32 %v467, %v502
    %v509 = vadd.f32 %v470, %v503
    %v510 = vadd.f32 %v473, %v502
    %v511 = vadd.f32 %v476, %v503
    %v512 = vadd.f32 %v479, %v502
    %v513 = vadd.f32 %v482, %v503
    %v514 = vadd.f32 %v485, %v502
    %v515 = vadd.f32 %v488, %v503
    %v516 = vadd.f32 %v491, %v502
    %v517 = vadd.f32 %v494, %v503
    %v518 = vadd.f32 %v497, %v502
    %v519 = vadd.f32 %v500, %v503
    %vm520 = vcmask 392192
    %v521 = vsel %vm520, %v504, -inf
    %v522 = vsel %vm520, %v505, -inf
    %v523 = vmax.f32 %v521, %v522
    %v524 = vrot.slane %v523, 4
    %v525 = vmax.f32 %v523, %v524
    %v526 = vrot.slane %v525, 2
    %v527 = vmax.f32 %v525, %v526
    %v528 = vrot.slane %v527, 1
    %v529 = vmax.f32 %v527, %v528
    %v530 = vsel %vm520, %v506, -inf
    %v531 = vsel %vm520, %v507, -inf
    %v532 = vmax.f32 %v530, %v531
    %v533 = vrot.slane %v532, 4
    %v534 = vmax.f32 %v532, %v533
    %v535 = vrot.slane %v534, 2
    %v536 = vmax.f32 %v534, %v535
    %v537 = vrot.slane %v536, 1
    %v538 = vmax.f32 %v536, %v537
    %v539 = vsel %vm520, %v508, -inf
    %v540 = vsel %vm520, %v509, -inf
    %v541 = vmax.f32 %v539, %v540
    %v542 = vrot.slane %v541, 4
    %v543 = vmax.f32 %v541, %v542
    %v544 = vrot.slane %v543, 2
    %v545 = vmax.f32 %v543, %v544
    %v546 = vrot.slane %v545, 1
    %v547 = vmax.f32 %v545, %v546
    %v548 = vsel %vm520, %v510, -inf
    %v549 = vsel %vm520, %v511, -inf
    %v550 = vmax.f32 %v548, %v549
    %v551 = vrot.slane %v550, 4
    %v552 = vmax.f32 %v550, %v551
    %v553 = vrot.slane %v552, 2
    %v554 = vmax.f32 %v552, %v553
    %v555 = vrot.slane %v554, 1
    %v556 = vmax.f32 %v554, %v555
    %v557 = vsel %vm520, %v512, -inf
    %v558 = vsel %vm520, %v513, -inf
    %v559 = vmax.f32 %v557, %v558
    %v560 = vrot.slane %v559, 4
    %v561 = vmax.f32 %v559, %v560
    %v562 = vrot.slane %v561, 2
    %v563 = vmax.f32 %v561, %v562
    %v564 = vrot.slane %v563, 1
    %v565 = vmax.f32 %v563, %v564
    %v566 = vsel %vm520, %v514, -inf
    %v567 = vsel %vm520, %v515, -inf
    %v568 = vmax.f32 %v566, %v567
    %v569 = vrot.slane %v568, 4
    %v570 = vmax.f32 %v568, %v569
    %v571 = vrot.slane %v570, 2
    %v572 = vmax.f32 %v570, %v571
    %v573 = vrot.slane %v572, 1
    %v574 = vmax.f32 %v572, %v573
    %v575 = vsel %vm520, %v516, -inf
    %v576 = vsel %vm520, %v517, -inf
    %v577 = vmax.f32 %v575, %v576
    %v578 = vrot.slane %v577, 4
    %v579 = vmax.f32 %v577, %v578
    %v580 = vrot.slane %v579, 2
    %v581 = vmax.f32 %v579, %v580
    %v582 = vrot.slane %v581, 1
    %v583 = vmax.f32 %v581, %v582
    %v584 = vsel %vm520, %v518, -inf
    %v585 = vsel %vm520, %v519, -inf
    %v586 = vmax.f32 %v584, %v585
    %v587 = vrot.slane %v586, 4
    %v588 = vmax.f32 %v586, %v587
    %v589 = vrot.slane %v588, 2
    %v590 = vmax.f32 %v588, %v589
    %v591 = vrot.slane %v590, 1
    %v592 = vmax.f32 %v590, %v591
    %v593 = vld [vmem:[%s3] sm:$0x1]
    %v595 = vperm.slane %v593, 0
    %v597 = vadd.f32 %v529, %v595
    %v598 = vadd.f32 %v538, %v595
    %v599 = vadd.f32 %v547, %v595
    %v600 = vadd.f32 %v556, %v595
    %v601 = vadd.f32 %v565, %v595
    %v602 = vadd.f32 %v574, %v595
    %v603 = vadd.f32 %v583, %v595
    %v604 = vadd.f32 %v592, %v595
    %v605 = vmax.f32 %v597, 0.0
    %v606 = vmax.f32 %v598, 0.0
    %v607 = vmax.f32 %v599, 0.0
    %v608 = vmax.f32 %v600, 0.0
    %v609 = vmax.f32 %v601, 0.0
    %v610 = vmax.f32 %v602, 0.0
    %v611 = vmax.f32 %v603, 0.0
    %v612 = vmax.f32 %v604, 0.0
    %v613 = vld [vmem:[%s4] sm:$0xff]
    %v614 = vld [vmem:[%s4 + $0x8] sm:$0xff]
    %v615 = vld [vmem:[%s4 + $0x10] sm:$0xff]
    %v616 = vld [vmem:[%s4 + $0x18] sm:$0xff]
    %v617 = vld [vmem:[%s4 + $0x20] sm:$0xff]
    %v618 = vld [vmem:[%s4 + $0x28] sm:$0xff]
    %v619 = vld [vmem:[%s5] sm:$0x1]
    %v621 = vperm.slane %v619, 0
    %v631 = vrot.slane %v606, 7
    %vm632 = vcmask 1041409
    %v633 = vsel %vm632, %v631, %v605
    %v634 = vrot.slane %v607, 6
    %vm635 = vcmask 1042434
    %v636 = vsel %vm635, %v634, %v633
    %v637 = vrot.slane %v608, 5
    %vm638 = vcmask 1043459
    %v639 = vsel %vm638, %v637, %v636
    %v640 = vrot.slane %v609, 4
    %vm641 = vcmask 1044484
    %v642 = vsel %vm641, %v640, %v639
    %v643 = vrot.slane %v610, 3
    %vm644 = vcmask 1045509
    %v645 = vsel %vm644, %v643, %v642
    %v646 = vrot.slane %v611, 2
    %vm647 = vcmask 1046534
    %v648 = vsel %vm647, %v646, %v645
    %v649 = vrot.slane %v612, 1
    %vm650 = vcmask 1047559
    %v651 = vsel %vm650, %v649, %v648
    %v652 = vsel %vm520, %v651, 0
    %654 = vmatpush.msra.mxu0 0.0
    %655 = vmatpush.msra.mxu0 0.0
    %656 = vmatpush.msra.mxu0 0.0
    %657 = vmatpush.msra.mxu0 0.0
    %658 = vmatpush.msra.mxu0 0.0
    %659 = vmatpush.msra.mxu0 0.0
    %660 = vmatpush.msra.mxu0 0.0
    %661 = vmatpush.msra.mxu0 0.0
    %662 = vmatpush.msra.mxu0 0.0
    %663 = vmatpush.msra.mxu0 0.0
    %664 = vmatpush.msra.mxu0 %v618
    %665 = vmatpush.msra.mxu0 %v617
    %666 = vmatpush.msra.mxu0 %v616
    %667 = vmatpush.msra.mxu0 %v615
    %668 = vmatpush.msra.mxu0 %v614
    %669 = vmatpush.msra.mxu0 %v613
    %670 = vmatmul.f32.gmra.mxu0 %v652
    %v671 = vpop.f32.mrf.mxu0
    %v672 = vadd.f32 %v621, %v671
    %673 = vdwg.mxu0
    %674 = vst [vmem:[#allocation2] sm:$0xff] %v672
    // Predicated region
    $region26: #{tpu_custom_call.1} parent=1 // pred_check
      _
    $region27: #{tpu_custom_call.1} parent=1 // pred_check_branch
      %676 = sbr.rel (0) target = $region29
    $region28: #{tpu_custom_call.1} parent=1 // pred_region
      %678 = vsyncadd [#allocation3], 0
      %s680 = sshll.u32 [#allocation2], 4
      %s681 = int_to_ptr.vmem [resolvable:$true] %s680
      %s682 = sshll.u32 %s6, 4
      %s683 = int_to_ptr.hbm [resolvable:$true] %s682
      %685 = dma.vmem_to_hbm [thread:$0]  %s681, 128, %s683, [#allocation3]
    $region29: #{tpu_custom_call.1} parent=1 // pred_fallthru
      _
    // Predicated region
    $region30: #{tpu_custom_call.1} parent=1 // pred_check
      _
    $region31: #{tpu_custom_call.1} parent=1 // pred_check_branch
      %687 = sbr.rel (0) target = $region33
    $region32: #{tpu_custom_call.1} parent=1 // pred_region
      %689 = dma.done [#allocation3], 128
    $region33: #{tpu_custom_call.1} parent=1 // pred_fallthru
      _
    %690 = vsyncpa [#allocation3], 1

</llo_original>
